<compile_context>
chip_gen: v7x
topology: tpu7x:2x2x1
jax: 0.10.0
libtpu: 0.0.40
codegen_flags: <defaults>
</compile_context>

<pallas_src>
import functools

import jax
import jax.numpy as jnp
from jax import lax
from jax.experimental import pallas as pl
from jax.experimental.pallas import tpu as pltpu

LANE = 128
TM_MAX = 128            # Gram row/col tile
TK_MAX_SINGLE = 4096    # K tile for the single-Gram-tile fast path (2 streams)
TK_MAX_GENERAL = 2048   # K tile for the tiled-Gram path (4 streams)

# A (m, k) contracted with B (m, k) over the last axis  ->  A @ B.T  (m, m)
_CONTRACT_LAST = (((1,), (1,)), ((), ()))


def _round_up(x, m):
    return (x + m - 1) // m * m


def _sublane(dtype):
    return {4: 8, 2: 16, 1: 32}.get(jnp.dtype(dtype).itemsize, 8)


def _pick_tile(extent, max_tile, granule):
    """Balanced tile <= max_tile (multiple of granule); returns (tile, padded)."""
    n = pl.cdiv(extent, max_tile)
    tile = _round_up(pl.cdiv(extent, n), granule)
    return tile, n * tile


# --------------------------------------------------------------------------
# Fast path: the whole Gram matrix is a single (tm, tm) tile.  grid = (nK,)
# --------------------------------------------------------------------------
def _gram_mse_single_kernel(g_ref, s_ref, o_ref, d_acc, *, inv_gram, inv_mse):
    k = pl.program_id(0)
    nk = pl.num_programs(0)

    @pl.when(k == 0)
    def _init():
        d_acc[...] = jnp.zeros_like(d_acc)

    g = g_ref[...]
    s = s_ref[...]
    d_acc[...] += (
        lax.dot_general(g, g, _CONTRACT_LAST, preferred_element_type=jnp.float32)
        - lax.dot_general(s, s, _CONTRACT_LAST, preferred_element_type=jnp.float32))

    @pl.when(k == nk - 1)
    def _finalize():
        diff = d_acc[...] * jnp.float32(inv_gram)
        o_ref[0, 0] = jnp.sum(diff * diff) * jnp.float32(inv_mse)


# --------------------------------------------------------------------------
# General path: upper-triangular Gram-tile schedule.  grid = (nTiles, nK)
# --------------------------------------------------------------------------
def _gram_mse_tiled_kernel(rows_ref, cols_ref,              # scalar prefetch (SMEM)
                           ga_ref, gb_ref, sa_ref, sb_ref,  # feature blocks (VMEM)
                           o_ref,                           # (1,1) SMEM output
                           d_acc, sse_acc,                  # VMEM scratch
                           *, inv_gram, inv_mse):
    t = pl.program_id(0)          # upper-triangular Gram tile index
    k = pl.program_id(1)          # K (reduction) tile index
    nt = pl.num_programs(0)
    nk = pl.num_programs(1)

    @pl.when((t == 0) & (k == 0))
    def _init_global():
        sse_acc[...] = jnp.zeros_like(sse_acc)

    @pl.when(k == 0)
    def _init_tile():
        d_acc[...] = jnp.zeros_like(d_acc)

    # Accumulate the Gram DIFFERENCE directly (one accumulator, no epilogue sub)
    d_acc[...] += (
        lax.dot_general(ga_ref[...], gb_ref[...], _CONTRACT_LAST,
                        preferred_element_type=jnp.float32)
        - lax.dot_general(sa_ref[...], sb_ref[...], _CONTRACT_LAST,
                          preferred_element_type=jnp.float32))

    @pl.when(k == nk - 1)
    def _accumulate_tile():
        # strictly-upper tiles stand in for their (skipped) mirror image
        w = jnp.where(rows_ref[t] == cols_ref[t],
                      jnp.float32(1.0), jnp.float32(2.0))
        diff = d_acc[...] * jnp.float32(inv_gram)
        sse_acc[...] += w * diff * diff          # pure VPU, no cross-lane work

    @pl.when((t == nt - 1) & (k == nk - 1))
    def _finalize():
        # single cross-lane reduce + scalar store for the whole kernel
        o_ref[0, 0] = jnp.sum(sse_acc[...]) * jnp.float32(inv_mse)


def style_loss(gen_feature, style_feature, *, interpret=False):
    """Pallas implementation of PyTorch StyleLoss.forward()."""
    assert gen_feature.shape == style_feature.shape
    assert gen_feature.dtype == style_feature.dtype
    a, b, c, d = gen_feature.shape
    M, K = a * b, c * d
    dtype = gen_feature.dtype
    itemsize = jnp.dtype(dtype).itemsize

    gf = gen_feature.reshape(M, K)
    sf = style_feature.reshape(M, K)

    # --- tiling (respect sublane granularity of the input dtype) ------------
    tm, m_pad = _pick_tile(M, TM_MAX, _sublane(dtype))
    ni = m_pad // tm
    single = (ni == 1)

    tk, k_pad = _pick_tile(K, TK_MAX_SINGLE if single else TK_MAX_GENERAL, LANE)
    nk = k_pad // tk

    if (m_pad, k_pad) != (M, K):
        # zero rows/cols contribute nothing to either Gram matrix (the
        # normalizers below use the TRUE M, K), so zero-padding is exact.
        gf = jnp.pad(gf, ((0, m_pad - M), (0, k_pad - K)))
        sf = jnp.pad(sf, ((0, m_pad - M), (0, k_pad - K)))

    inv_gram = 1.0 / float(M * K)   # Gram normalizer (a*b*c*d)
    inv_mse = 1.0 / float(M * M)    # MSE mean

    if single:
        kernel = functools.partial(_gram_mse_single_kernel,
                                   inv_gram=inv_gram, inv_mse=inv_mse)
        out = pl.pallas_call(
            kernel,
            out_shape=jax.ShapeDtypeStruct((1, 1), jnp.float32),
            grid=(nk,),
            in_specs=[pl.BlockSpec((tm, tk), lambda k: (0, k)),
                      pl.BlockSpec((tm, tk), lambda k: (0, k))],
            out_specs=pl.BlockSpec((1, 1), lambda k: (0, 0),
                                   memory_space=pltpu.SMEM),
            scratch_shapes=[pltpu.VMEM((tm, tm), jnp.float32)],
            compiler_params=pltpu.CompilerParams(
                dimension_semantics=("arbitrary",)),
            cost_estimate=pl.CostEstimate(
                flops=4 * tm * tm * k_pad,
                transcendentals=0,
                bytes_accessed=2 * m_pad * k_pad * itemsize + 4),
            interpret=interpret,
        )(gf, sf)
        return out[0, 0]

    # upper-triangular tile schedule (Gram symmetry -> ~2x fewer MXU passes)
    rows, cols = [], []
    for i in range(ni):
        for j in range(i, ni):
            rows.append(i)
            cols.append(j)
    nt = len(rows)
    rows = jnp.asarray(rows, dtype=jnp.int32)
    cols = jnp.asarray(cols, dtype=jnp.int32)

    kernel = functools.partial(_gram_mse_tiled_kernel,
                               inv_gram=inv_gram, inv_mse=inv_mse)
    lhs_map = lambda t, k, r, c: (r[t], k)   # rows-block of the Gram tile
    rhs_map = lambda t, k, r, c: (c[t], k)   # cols-block of the Gram tile

    out = pl.pallas_call(
        kernel,
        out_shape=jax.ShapeDtypeStruct((1, 1), jnp.float32),
        grid_spec=pltpu.PrefetchScalarGridSpec(
            num_scalar_prefetch=2,
            grid=(nt, nk),
            in_specs=[
                pl.BlockSpec((tm, tk), lhs_map),   # gen   (rows block)
                pl.BlockSpec((tm, tk), rhs_map),   # gen   (cols block)
                pl.BlockSpec((tm, tk), lhs_map),   # style (rows block)
                pl.BlockSpec((tm, tk), rhs_map),   # style (cols block)
            ],
            out_specs=pl.BlockSpec((1, 1), lambda t, k, r, c: (0, 0),
                                   memory_space=pltpu.SMEM),
            scratch_shapes=[
                pltpu.VMEM((tm, tm), jnp.float32),   # Gram-difference tile acc
                pltpu.VMEM((tm, tm), jnp.float32),   # squared-diff vector acc
            ],
        ),
        compiler_params=pltpu.CompilerParams(
            dimension_semantics=("arbitrary", "arbitrary")),
        cost_estimate=pl.CostEstimate(
            flops=4 * nt * tm * tm * k_pad,
            transcendentals=0,
            bytes_accessed=4 * nt * tm * k_pad * itemsize + 4),
        interpret=interpret,
    )(rows, cols, gf, gf, sf, sf)
    return out[0, 0]


def _style_loss_ref(gen_feature, style_feature):
    """Plain-JAX reference of the PyTorch semantics."""
    a, b, c, d = gen_feature.shape
    M, K = a * b, c * d
    gf = gen_feature.reshape(M, K).astype(jnp.float32)
    sf = style_feature.reshape(M, K).astype(jnp.float32)
    gg = jnp.matmul(gf, gf.T) / (M * K)
    sg = jnp.matmul(sf, sf.T) / (M * K)
    return jnp.mean((gg - sg) ** 2)


if __name__ == "__main__":
    key = jax.random.PRNGKey(0)

    # Exercise: single-tile fast path (1 and 2 K-tiles), general upper-tri
    # path (bf16), and general path with padding on both M and K.
    cases = [
        ((2, 8, 16, 16), jnp.float32),     # M=16,  K=256  -> fast path, 1 K-tile
        ((1, 8, 64, 96), jnp.float32),     # M=8,   K=6144 -> fast path, 2 K-tiles
        ((2, 128, 16, 16), jnp.bfloat16),  # M=256, K=256  -> 3 upper-tri tiles
        ((1, 200, 24, 24), jnp.float32),   # M=200, K=576  -> padded M and K
    ]

    for shp, dt in cases:
        key, kg, ks = jax.random.split(key, 3)
        # quantize test data to the bf16 grid so MXU-pass differences vs. the
        # XLA reference are pure accumulation-order noise
        gen = jax.random.normal(kg, shp, jnp.float32).astype(jnp.bfloat16).astype(dt)
        sty = jax.random.normal(ks, shp, jnp.float32).astype(jnp.bfloat16).astype(dt)

        loss = style_loss(gen, sty)
        jax.block_until_ready(loss)

        ref = _style_loss_ref(gen, sty)
        assert jnp.allclose(loss, ref, rtol=3e-4, atol=1e-9), (shp, loss, ref)

    print("KERNEL_OK")
</pallas_src>

<mosaic_0001>
module attributes {stable_mosaic.version = 11 : i64} {
  func.func @_gram_mse_single_kernel(%arg0: i32, %arg1: memref<16x256xf32, #tpu.memory_space<vmem>>, %arg2: memref<16x256xf32, #tpu.memory_space<vmem>>, %arg3: memref<1x1xf32, #tpu.memory_space<smem>>, %arg4: memref<16x16xf32, #tpu.memory_space<vmem>>) attributes {dimension_semantics = [#tpu.dimension_semantics<arbitrary>], iteration_bounds = array<i64: 1>, scalar_prefetch = 0 : i64, scratch_operands = 1 : i64, tpu.core_type = #tpu.core_type<tc>, window_params = [{transform_indices = @transform_0, window_bounds = array<i64: 16, 256>}, {transform_indices = @transform_1, window_bounds = array<i64: 16, 256>}, {transform_indices = @transform_2, window_bounds = array<i64: 1, 1>}]} {
    %c0_i32 = arith.constant 0 : i32
    %0 = arith.cmpi eq, %arg0, %c0_i32 : i32
    %1 = arith.extui %0 : i1 to i32
    %c0_i32_0 = arith.constant 0 : i32
    %2 = arith.cmpi ne, %1, %c0_i32_0 : i32
    scf.if %2 {
      %cst_11 = arith.constant 0.000000e+00 : f32
      %14 = vector.broadcast %cst_11 : f32 to vector<16x16xf32>
      %c0_12 = arith.constant 0 : index
      %c0_13 = arith.constant 0 : index
      %15 = vector.load %arg4[%c0_12, %c0_13] : memref<16x16xf32, #tpu.memory_space<vmem>>, vector<16x16xf32>
      tpu.vector_store %arg4[%c0_12, %c0_13], %14 {strides = array<i32>} : memref<16x16xf32, #tpu.memory_space<vmem>>, vector<16x16xf32>,
    } else {
    }
    %c0 = arith.constant 0 : index
    %c0_1 = arith.constant 0 : index
    %3 = vector.load %arg1[%c0, %c0_1] : memref<16x256xf32, #tpu.memory_space<vmem>>, vector<16x256xf32>
    %c0_2 = arith.constant 0 : index
    %c0_3 = arith.constant 0 : index
    %4 = vector.load %arg2[%c0_2, %c0_3] : memref<16x256xf32, #tpu.memory_space<vmem>>, vector<16x256xf32>
    %c0_4 = arith.constant 0 : index
    %c0_5 = arith.constant 0 : index
    %5 = vector.load %arg4[%c0_4, %c0_5] : memref<16x16xf32, #tpu.memory_space<vmem>>, vector<16x16xf32>
    %cst = arith.constant dense<0.000000e+00> : vector<16x16xf32>
    %6 = tpu.matmul %3, %3, %cst {dimension_numbers = #tpu.dot_dimension_numbers<[1], [1], [0], [0], [0, 0, 1, 0], [], []>} : vector<16x256xf32>, vector<16x256xf32>, vector<16x16xf32> -> vector<16x16xf32>
    %cst_6 = arith.constant dense<0.000000e+00> : vector<16x16xf32>
    %7 = tpu.matmul %4, %4, %cst_6 {dimension_numbers = #tpu.dot_dimension_numbers<[1], [1], [0], [0], [0, 0, 1, 0], [], []>} : vector<16x256xf32>, vector<16x256xf32>, vector<16x16xf32> -> vector<16x16xf32>
    %8 = arith.subf %6, %7 : vector<16x16xf32>
    %9 = arith.addf %5, %8 : vector<16x16xf32>
    %c0_7 = arith.constant 0 : index
    %c0_8 = arith.constant 0 : index
    %10 = vector.load %arg4[%c0_7, %c0_8] : memref<16x16xf32, #tpu.memory_space<vmem>>, vector<16x16xf32>
    tpu.vector_store %arg4[%c0_7, %c0_8], %9 {strides = array<i32>} : memref<16x16xf32, #tpu.memory_space<vmem>>, vector<16x16xf32>,
    %c0_i32_9 = arith.constant 0 : i32
    %11 = arith.cmpi eq, %arg0, %c0_i32_9 : i32
    %12 = arith.extui %11 : i1 to i32
    %c0_i32_10 = arith.constant 0 : i32
    %13 = arith.cmpi ne, %12, %c0_i32_10 : i32
    scf.if %13 {
      %c0_11 = arith.constant 0 : index
      %c0_12 = arith.constant 0 : index
      %14 = vector.load %arg4[%c0_11, %c0_12] : memref<16x16xf32, #tpu.memory_space<vmem>>, vector<16x16xf32>
      %cst_13 = arith.constant 2.44140625E-4 : f32
      %15 = vector.broadcast %cst_13 : f32 to vector<16x16xf32>
      %16 = arith.mulf %14, %15 : vector<16x16xf32>
      %17 = arith.mulf %16, %16 : vector<16x16xf32>
      %18 = vector.shape_cast %17 : vector<16x16xf32> to vector<1x16x16xf32>
      %cst_14 = arith.constant dense<0.000000e+00> : vector<1xf32>
      %19 = vector.multi_reduction <add>, %18, %cst_14 [1, 2] : vector<1x16x16xf32> to vector<1xf32>
      %20 = vector.shape_cast %19 : vector<1xf32> to vector<1x1x1xf32>
      %21 = vector.extract %20[0, 0, 0] : f32 from vector<1x1x1xf32>
      %cst_15 = arith.constant 3.906250e-03 : f32
      %22 = arith.mulf %21, %cst_15 : f32
      %c0_16 = arith.constant 0 : index
      %c0_17 = arith.constant 0 : index
      %23 = memref.load %arg3[%c0_16, %c0_17] : memref<1x1xf32, #tpu.memory_space<smem>>
      memref.store %22, %arg3[%c0_16, %c0_17] : memref<1x1xf32, #tpu.memory_space<smem>>
    } else {
    }
    return
  }
  func.func @transform_0(%arg0: i32) -> (i32, i32) {
    %c0_i32 = arith.constant 0 : i32
    %c0_i32_0 = arith.constant 0 : i32
    return %c0_i32, %arg0 : i32, i32
  }
  func.func @transform_1(%arg0: i32) -> (i32, i32) {
    %c0_i32 = arith.constant 0 : i32
    %c0_i32_0 = arith.constant 0 : i32
    return %c0_i32, %arg0 : i32, i32
  }
  func.func @transform_2(%arg0: i32) -> (i32, i32) {
    %c0_i32 = arith.constant 0 : i32
    %c0_i32_0 = arith.constant 0 : i32
    %c0_i32_1 = arith.constant 0 : i32
    return %c0_i32, %c0_i32_0 : i32, i32
  }
}

</mosaic_0001>

<llo_original>
// kernel: tpu_custom_call.1
$region0: #{tpu_custom_call.1}
  #allocation0 [shape = 'u32[]', space=smem, size = 0x4, offset = 0x4, fixed_abs, tag = 'smem constant byte address 0x4 - core index']
  #allocation1 [shape = 'u32[144,128]{1,0:T(1,128)}', space=vmem, size = 0x12000, scoped, tag = 'internal scratch']
  #allocation2 [shape = 'f32[16,16]{1,0:T(8,128)}', space=vmem, size = 0x2000, scoped, tag = 'scratch operand']
  %s0 = inlined_call_operand.hbm [shape: f32[16,256], index: 0, kind: input, shape index: {}]
  %s1 = inlined_call_operand.hbm [shape: f32[16,256], index: 1, kind: input, shape index: {}]
  %s2 = inlined_call_operand.hbm [shape: f32[1,1], index: 2, kind: output, shape index: {}]
  %s3 = sld [smem:[#allocation0]]
  $region34: #{tpu_custom_call.1} parent=0
    _
  %s5 = ssub.s32 1, %s3
  %s6 = scalar_select 0, %s5, %s3
  $region1: #{tpu_custom_call.1} parent=0
    #allocation3 [shape = 'u8[16384]{0}', space=vmem, size = 0x4000, scoped, tag = 'input window, operand 0, single buffered']
    #allocation4 [shape = 's32[1]{0}', space=sflag, size = 0x4, scoped, tag = 'scoped memory for tpu_custom_call.1']
    #allocation5 [shape = 's32[1]{0}', space=sflag, size = 0x4, scoped, tag = 'scoped memory for tpu_custom_call.1']
    #allocation6 [shape = 'u8[16384]{0}', space=vmem, size = 0x4000, scoped, tag = 'input window, operand 1, single buffered']
    #allocation7 [shape = 's32[1]{0}', space=sflag, size = 0x4, scoped, tag = 'scoped memory for tpu_custom_call.1']
    #allocation8 [shape = 'u8[512]{0}', space=smem, size = 0x200, scoped, tag = 'output window, operand 0, single buffered']
    %7 = vsyncpa [#allocation4], 0
    %8 = vsyncpa [#allocation7], 0
    %9 = vsyncpa [#allocation5], 0
    // Predicated region
    $region2: #{tpu_custom_call.1} parent=1 // pred_check
      _
    $region3: #{tpu_custom_call.1} parent=1 // pred_check_branch
      %11 = sbr.rel (0) target = $region5
    $region4: #{tpu_custom_call.1} parent=1 // pred_region
      %s13 = ssub.s32 512, 512
      %14 = vsyncadd [#allocation4], %s13
      %s15 = sshll.u32 [#allocation3], 4
      %s16 = int_to_ptr.vmem [resolvable:$true] %s15
      %21 = dma.hbm_to_vmem [thread:$0]  %s0, 512, %s16, [#allocation4], 256, 256, 16
    $region5: #{tpu_custom_call.1} parent=1 // pred_fallthru
      _
    // Predicated region
    $region6: #{tpu_custom_call.1} parent=1 // pred_check
      _
    $region7: #{tpu_custom_call.1} parent=1 // pred_check_branch
      %23 = sbr.rel (0) target = $region9
    $region8: #{tpu_custom_call.1} parent=1 // pred_region
      %s25 = ssub.s32 512, 512
      %26 = vsyncadd [#allocation7], %s25
      %s27 = sshll.u32 [#allocation6], 4
      %s28 = int_to_ptr.vmem [resolvable:$true] %s27
      %33 = dma.hbm_to_vmem [thread:$0]  %s1, 512, %s28, [#allocation7], 256, 256, 16
    $region9: #{tpu_custom_call.1} parent=1 // pred_fallthru
      _
    // Predicated region
    $region10: #{tpu_custom_call.1} parent=1 // pred_check
      _
    $region11: #{tpu_custom_call.1} parent=1 // pred_check_branch
      %35 = sbr.rel (0) target = $region13
    $region12: #{tpu_custom_call.1} parent=1 // pred_region
      %36 = dma.done [#allocation4], 512
    $region13: #{tpu_custom_call.1} parent=1 // pred_fallthru
      _
    // Predicated region
    $region14: #{tpu_custom_call.1} parent=1 // pred_check
      _
    $region15: #{tpu_custom_call.1} parent=1 // pred_check_branch
      %38 = sbr.rel (0) target = $region17
    $region16: #{tpu_custom_call.1} parent=1 // pred_region
      %39 = dma.done [#allocation7], 512
    $region17: #{tpu_custom_call.1} parent=1 // pred_fallthru
      _
    %p40 = scmp.eq.s32.totalorder 0, 0
    // Predicated region
    $region18: #{tpu_custom_call.1} parent=1 // pred_check
      %p41 = pneg %p40
    $region19: #{tpu_custom_call.1} parent=1 // pred_check_branch
      %43 = sbr.rel (%p41) target = $region21
    $region20: #{tpu_custom_call.1} parent=1 // pred_region
      %vm44 = vcmask 130048
      %45 = vst.msk [vmem:[#allocation2] sm:$0xff] %vm44, 0.0
      %46 = vst.msk [vmem:[#allocation2 + $0x8] sm:$0xff] %vm44, 0.0
    $region21: #{tpu_custom_call.1} parent=1 // pred_fallthru
      _
    %v47 = vld [vmem:[#allocation3] sm:$0xff]
    %v48 = vld [vmem:[#allocation3 + $0x8] sm:$0xff]
    %v49 = vld [vmem:[#allocation3 + $0x10] sm:$0xff]
    %v50 = vld [vmem:[#allocation3 + $0x18] sm:$0xff]
    %v51 = vld [vmem:[#allocation6] sm:$0xff]
    %v52 = vld [vmem:[#allocation6 + $0x8] sm:$0xff]
    %v53 = vld [vmem:[#allocation6 + $0x10] sm:$0xff]
    %v54 = vld [vmem:[#allocation6 + $0x18] sm:$0xff]
    %v55 = vld [vmem:[#allocation2] sm:$0xff]
    %v56 = vld [vmem:[#allocation2 + $0x8] sm:$0xff]
    %57 = vmatprep.subr.mxu0 %v48
    %58 = vmatpush1.xpose.msra.mxu0 %v47
    %59 = vmatprep.subr.mxu0 %v50
    %60 = vmatpush1.xpose.msra.mxu0 %v49
    %61 = vmatprep.subr.mxu0 0.0
    %62 = vmatpush1.xpose.msra.mxu0 0.0
    %63 = vmatprep.subr.mxu0 0.0
    %64 = vmatpush1.xpose.msra.mxu0 0.0
    %65 = vmatprep.subr.mxu0 0.0
    %66 = vmatpush1.xpose.msra.mxu0 0.0
    %67 = vmatprep.subr.mxu0 0.0
    %68 = vmatpush1.xpose.msra.mxu0 0.0
    %69 = vmatprep.subr.mxu0 0.0
    %70 = vmatpush1.xpose.msra.mxu0 0.0
    %71 = vmatprep.subr.mxu0 0.0
    %72 = vmatpush1.xpose.msra.mxu0 0.0
    %73 = vmatprep.subr.mxu0 0.0
    %74 = vmatpush1.xpose.msra.mxu0 0.0
    %75 = vmatprep.subr.mxu0 0.0
    %76 = vmatpush1.xpose.msra.mxu0 0.0
    %77 = vmatprep.subr.mxu0 0.0
    %78 = vmatpush1.xpose.msra.mxu0 0.0
    %79 = vmatprep.subr.mxu0 0.0
    %80 = vmatpush1.xpose.msra.mxu0 0.0
    %81 = vmatprep.subr.mxu0 0.0
    %82 = vmatpush1.xpose.msra.mxu0 0.0
    %83 = vmatprep.subr.mxu0 0.0
    %84 = vmatpush1.xpose.msra.mxu0 0.0
    %85 = vmatprep.subr.mxu0 0.0
    %86 = vmatpush1.xpose.msra.mxu0 0.0
    %87 = vmatprep.subr.mxu0 0.0
    %88 = vmatpush1.xpose.msra.mxu0 0.0
    %89 = vmatprep.subr.mxu0 0.0
    %90 = vmatpush1.xpose.msra.mxu0 0.0
    %91 = vmatprep.subr.mxu0 0.0
    %92 = vmatpush1.xpose.msra.mxu0 0.0
    %93 = vmatprep.subr.mxu0 0.0
    %94 = vmatpush1.xpose.msra.mxu0 0.0
    %95 = vmatprep.subr.mxu0 0.0
    %96 = vmatpush1.xpose.msra.mxu0 0.0
    %97 = vmatprep.subr.mxu0 0.0
    %98 = vmatpush1.xpose.msra.mxu0 0.0
    %99 = vmatprep.subr.mxu0 0.0
    %100 = vmatpush1.xpose.msra.mxu0 0.0
    %101 = vmatprep.subr.mxu0 0.0
    %102 = vmatpush1.xpose.msra.mxu0 0.0
    %103 = vmatprep.subr.mxu0 0.0
    %104 = vmatpush1.xpose.msra.mxu0 0.0
    %105 = vmatprep.subr.mxu0 0.0
    %106 = vmatpush1.xpose.msra.mxu0 0.0
    %107 = vmatprep.subr.mxu0 0.0
    %108 = vmatpush1.xpose.msra.mxu0 0.0
    %109 = vmatprep.subr.mxu0 0.0
    %110 = vmatpush1.xpose.msra.mxu0 0.0
    %111 = vmatprep.subr.mxu0 0.0
    %112 = vmatpush1.xpose.msra.mxu0 0.0
    %113 = vmatprep.subr.mxu0 0.0
    %114 = vmatpush1.xpose.msra.mxu0 0.0
    %115 = vmatprep.subr.mxu0 0.0
    %116 = vmatpush1.xpose.msra.mxu0 0.0
    %117 = vmatprep.subr.mxu0 0.0
    %118 = vmatpush1.xpose.msra.mxu0 0.0
    %119 = vmatprep.subr.mxu0 0.0
    %120 = vmatpush1.xpose.msra.mxu0 0.0
    %121 = vmatprep.mubr.f32.mxu0 %v48
    %122 = vmatmul.mubr.f32.gmra.mrb[0].mxu0 %v47
    %v123 = vpop.f32.mrb[0].mxu0
    %v124 = vadd.f32 0.0, %v123
    %v125 = vpop.f32.mrb[0].mxu0
    %126 = vmatprep.mubr.f32.mxu0 %v50
    %127 = vmatmul.mubr.f32.gmra.mrb[0].mxu0 %v49
    %v128 = vpop.f32.mrb[0].mxu0
    %v129 = vadd.f32 0.0, %v128
    %v130 = vpop.f32.mrb[0].mxu0
    %131 = vdwg.mxu0
    %132 = vmatprep.subr.mxu0 %v52
    %133 = vmatpush1.xpose.msra.mxu0 %v51
    %134 = vmatprep.subr.mxu0 %v54
    %135 = vmatpush1.xpose.msra.mxu0 %v53
    %136 = vmatprep.subr.mxu0 0.0
    %137 = vmatpush1.xpose.msra.mxu0 0.0
    %138 = vmatprep.subr.mxu0 0.0
    %139 = vmatpush1.xpose.msra.mxu0 0.0
    %140 = vmatprep.subr.mxu0 0.0
    %141 = vmatpush1.xpose.msra.mxu0 0.0
    %142 = vmatprep.subr.mxu0 0.0
    %143 = vmatpush1.xpose.msra.mxu0 0.0
    %144 = vmatprep.subr.mxu0 0.0
    %145 = vmatpush1.xpose.msra.mxu0 0.0
    %146 = vmatprep.subr.mxu0 0.0
    %147 = vmatpush1.xpose.msra.mxu0 0.0
    %148 = vmatprep.subr.mxu0 0.0
    %149 = vmatpush1.xpose.msra.mxu0 0.0
    %150 = vmatprep.subr.mxu0 0.0
    %151 = vmatpush1.xpose.msra.mxu0 0.0
    %152 = vmatprep.subr.mxu0 0.0
    %153 = vmatpush1.xpose.msra.mxu0 0.0
    %154 = vmatprep.subr.mxu0 0.0
    %155 = vmatpush1.xpose.msra.mxu0 0.0
    %156 = vmatprep.subr.mxu0 0.0
    %157 = vmatpush1.xpose.msra.mxu0 0.0
    %158 = vmatprep.subr.mxu0 0.0
    %159 = vmatpush1.xpose.msra.mxu0 0.0
    %160 = vmatprep.subr.mxu0 0.0
    %161 = vmatpush1.xpose.msra.mxu0 0.0
    %162 = vmatprep.subr.mxu0 0.0
    %163 = vmatpush1.xpose.msra.mxu0 0.0
    %164 = vmatprep.subr.mxu0 0.0
    %165 = vmatpush1.xpose.msra.mxu0 0.0
    %166 = vmatprep.subr.mxu0 0.0
    %167 = vmatpush1.xpose.msra.mxu0 0.0
    %168 = vmatprep.subr.mxu0 0.0
    %169 = vmatpush1.xpose.msra.mxu0 0.0
    %170 = vmatprep.subr.mxu0 0.0
    %171 = vmatpush1.xpose.msra.mxu0 0.0
    %172 = vmatprep.subr.mxu0 0.0
    %173 = vmatpush1.xpose.msra.mxu0 0.0
    %174 = vmatprep.subr.mxu0 0.0
    %175 = vmatpush1.xpose.msra.mxu0 0.0
    %176 = vmatprep.subr.mxu0 0.0
    %177 = vmatpush1.xpose.msra.mxu0 0.0
    %178 = vmatprep.subr.mxu0 0.0
    %179 = vmatpush1.xpose.msra.mxu0 0.0
    %180 = vmatprep.subr.mxu0 0.0
    %181 = vmatpush1.xpose.msra.mxu0 0.0
    %182 = vmatprep.subr.mxu0 0.0
    %183 = vmatpush1.xpose.msra.mxu0 0.0
    %184 = vmatprep.subr.mxu0 0.0
    %185 = vmatpush1.xpose.msra.mxu0 0.0
    %186 = vmatprep.subr.mxu0 0.0
    %187 = vmatpush1.xpose.msra.mxu0 0.0
    %188 = vmatprep.subr.mxu0 0.0
    %189 = vmatpush1.xpose.msra.mxu0 0.0
    %190 = vmatprep.subr.mxu0 0.0
    %191 = vmatpush1.xpose.msra.mxu0 0.0
    %192 = vmatprep.subr.mxu0 0.0
    %193 = vmatpush1.xpose.msra.mxu0 0.0
    %194 = vmatprep.subr.mxu0 0.0
    %195 = vmatpush1.xpose.msra.mxu0 0.0
    %196 = vmatprep.mubr.f32.mxu0 %v52
    %197 = vmatmul.mubr.f32.gmra.mrb[0].mxu0 %v51
    %v198 = vpop.f32.mrb[0].mxu0
    %v199 = vadd.f32 0.0, %v198
    %v200 = vpop.f32.mrb[0].mxu0
    %201 = vmatprep.mubr.f32.mxu0 %v54
    %202 = vmatmul.mubr.f32.gmra.mrb[0].mxu0 %v53
    %v203 = vpop.f32.mrb[0].mxu0
    %v204 = vadd.f32 0.0, %v203
    %v205 = vpop.f32.mrb[0].mxu0
    %206 = vdwg.mxu0
    %v207 = vsub.f32 %v124, %v199
    %v208 = vsub.f32 %v129, %v204
    %v209 = vadd.f32 %v55, %v207
    %v210 = vadd.f32 %v56, %v208
    %vm211 = vcmask 130048
    %212 = vst.msk [vmem:[#allocation2] sm:$0xff] %vm211, %v209
    %213 = vst.msk [vmem:[#allocation2 + $0x8] sm:$0xff] %vm211, %v210
    // Predicated region
    $region22: #{tpu_custom_call.1} parent=1 // pred_check
      %p214 = pneg %p40
    $region23: #{tpu_custom_call.1} parent=1 // pred_check_branch
      %216 = sbr.rel (%p214) target = $region25
    $region24: #{tpu_custom_call.1} parent=1 // pred_region
      %v217 = vld [vmem:[#allocation2] sm:$0xff]
      %v218 = vld [vmem:[#allocation2 + $0x8] sm:$0xff]
      %v219 = vmul.f32 %v217, 0.00024414063
      %v220 = vmul.f32 %v218, 0.00024414063
      %v221 = vmul.f32 %v219, %v219
      %v222 = vmul.f32 %v220, %v220
      %v223 = vsel %vm211, %v221, 0.0
      %v224 = vsel %vm211, %v222, 0.0
      %v225 = vadd.f32 %v223, %v224
      %226 = vadd.xlane.f32.xlu0 %v225
      %v227 = vpop.xlane.xlu0 %226
      %v228 = vrot.slane %v227, 4
      %v229 = vadd.f32 %v227, %v228
      %v230 = vrot.slane %v229, 2
      %v231 = vadd.f32 %v229, %v230
      %v232 = vrot.slane %v231, 1
      %v233 = vadd.f32 %v231, %v232
      %s234 = vtos %v233
      %s235 = smul.f32 %s234, 0.00390625
      %s236 = scalar_lea.smem [#allocation8], 0
      %237 = sst [smem:[%s236]] %s235
    $region25: #{tpu_custom_call.1} parent=1 // pred_fallthru
      _
    // Predicated region
    $region26: #{tpu_custom_call.1} parent=1 // pred_check
      _
    $region27: #{tpu_custom_call.1} parent=1 // pred_check_branch
      %239 = sbr.rel (0) target = $region29
    $region28: #{tpu_custom_call.1} parent=1 // pred_region
      %s241 = ssub.s32 16, 16
      %242 = vsyncadd [#allocation5], %s241
      %245 = dma.smem_to_hbm [#allocation8], 16, %s2, [#allocation5]
    $region29: #{tpu_custom_call.1} parent=1 // pred_fallthru
      _
    // Predicated region
    $region30: #{tpu_custom_call.1} parent=1 // pred_check
      _
    $region31: #{tpu_custom_call.1} parent=1 // pred_check_branch
      %247 = sbr.rel (0) target = $region33
    $region32: #{tpu_custom_call.1} parent=1 // pred_region
      %248 = dma.done [#allocation5], 16
    $region33: #{tpu_custom_call.1} parent=1 // pred_fallthru
      _
    %249 = sfence
    %250 = vsyncpa [#allocation4], 1
    %251 = vsyncpa [#allocation7], 1
    %252 = vsyncpa [#allocation5], 1

</llo_original>
